<compile_context>
chip_gen: v7x
topology: tpu7x:2x2x1
jax: 0.10.0
libtpu: 0.0.40
codegen_flags: <defaults>
</compile_context>

<pallas_src>
import jax
import jax.numpy as jnp
from jax.experimental import pallas as pl
from jax.experimental.pallas import tpu as pltpu

INPUT_DIM = 512   # fixed by the module (ClassBlock_IV(512, 2, ...))
CLASS_NUM = 2
TM_MAX = 2048     # rows per x tile: 2048*512*4B = 4 MiB, 8 MiB double-buffered


def _round_up(n, m):
    return ((n + m - 1) // m) * m


def linear_kernel(x_ref, w_ref, b_ref, o_ref):
    # x_ref: (TM, 512), w_ref: (512, 2), b_ref: (1, 2), o_ref: (TM, 2)
    y = jnp.dot(x_ref[...], w_ref[...], preferred_element_type=jnp.float32)
    o_ref[...] = (y + b_ref[...]).astype(o_ref.dtype)


def verif_net_forward(x, w, b):
    """x: (B, 512) f32, w: (512, 2) f32, b: (2,) f32 -> (B, 2) f32."""
    B = x.shape[0]

    # Tile height: multiple of 8 (sublane constraint), capped at TM_MAX.
    tm = min(TM_MAX, _round_up(max(B, 1), 8))
    B_pad = _round_up(B, tm)
    if B_pad != B:
        x = jnp.pad(x, ((0, B_pad - B), (0, 0)))

    b2d = b.reshape(1, CLASS_NUM)
    grid = (B_pad // tm,)

    out = pl.pallas_call(
        linear_kernel,
        out_shape=jax.ShapeDtypeStruct((B_pad, CLASS_NUM), jnp.float32),
        grid=grid,
        in_specs=[
            # x streamed in (tm, 512) tiles along the batch axis.
            pl.BlockSpec((tm, INPUT_DIM), lambda i: (i, 0)),
            # weight / bias: constant index_map -> stay resident in VMEM.
            pl.BlockSpec((INPUT_DIM, CLASS_NUM), lambda i: (0, 0)),
            pl.BlockSpec((1, CLASS_NUM), lambda i: (0, 0)),
        ],
        out_specs=pl.BlockSpec((tm, CLASS_NUM), lambda i: (i, 0)),
        compiler_params=pltpu.CompilerParams(
            dimension_semantics=("parallel",),
        ),
    )(x, w, b2d)

    return out[:B] if B_pad != B else out


def init_params(key):
    # weights_init_classifier: Linear weight ~ N(0, std=0.001), bias = 0
    wkey, = jax.random.split(key, 1)
    w_torch = 0.001 * jax.random.normal(wkey, (CLASS_NUM, INPUT_DIM), jnp.float32)
    w = w_torch.T                          # (512, 2) for x @ W^T
    b = jnp.zeros((CLASS_NUM,), jnp.float32)
    return w, b


if __name__ == "__main__":
    key = jax.random.PRNGKey(0)
    k_x, k_p = jax.random.split(key)

    B = 8
    x = jax.random.normal(k_x, (B, INPUT_DIM), jnp.float32)
    w, b = init_params(k_p)

    y = verif_net_forward(x, w, b)
    jax.block_until_ready(y)

    # sanity check against plain-JAX reference
    y_ref = x @ w + b[None, :]
    assert y.shape == (B, CLASS_NUM)
    assert jnp.allclose(y, y_ref, atol=1e-5, rtol=1e-5)

    # also exercise a ragged batch (B not a multiple of 8) to cover the
    # pad-and-slice path
    B2 = 13
    x2 = jax.random.normal(jax.random.PRNGKey(1), (B2, INPUT_DIM), jnp.float32)
    y2 = verif_net_forward(x2, w, b)
    jax.block_until_ready(y2)
    y2_ref = x2 @ w + b[None, :]
    assert y2.shape == (B2, CLASS_NUM)
    assert jnp.allclose(y2, y2_ref, atol=1e-5, rtol=1e-5)

    print("KERNEL_OK")
</pallas_src>

<mosaic_0001>
module attributes {stable_mosaic.version = 11 : i64} {
  func.func @linear_kernel(%arg0: i32, %arg1: memref<8x512xf32, #tpu.memory_space<vmem>>, %arg2: memref<512x2xf32, #tpu.memory_space<vmem>>, %arg3: memref<1x2xf32, #tpu.memory_space<vmem>>, %arg4: memref<8x2xf32, #tpu.memory_space<vmem>>) attributes {dimension_semantics = [#tpu.dimension_semantics<parallel>], iteration_bounds = array<i64: 1>, scalar_prefetch = 0 : i64, scratch_operands = 0 : i64, tpu.core_type = #tpu.core_type<tc>, window_params = [{transform_indices = @transform_0, window_bounds = array<i64: 8, 512>}, {pipeline_mode = #tpu.pipeline_mode<synchronous>, transform_indices = @transform_1, window_bounds = array<i64: 512, 2>}, {pipeline_mode = #tpu.pipeline_mode<synchronous>, transform_indices = @transform_2, window_bounds = array<i64: 1, 2>}, {transform_indices = @transform_3, window_bounds = array<i64: 8, 2>}]} {
    %c0 = arith.constant 0 : index
    %c0_0 = arith.constant 0 : index
    %0 = vector.load %arg1[%c0, %c0_0] : memref<8x512xf32, #tpu.memory_space<vmem>>, vector<8x512xf32>
    %c0_1 = arith.constant 0 : index
    %c0_2 = arith.constant 0 : index
    %1 = vector.load %arg2[%c0_1, %c0_2] : memref<512x2xf32, #tpu.memory_space<vmem>>, vector<512x2xf32>
    %cst = arith.constant dense<0.000000e+00> : vector<8x2xf32>
    %2 = tpu.matmul %0, %1, %cst {dimension_numbers = #tpu.dot_dimension_numbers<[1], [0], [0], [1], [0, 0, 1, 1], [], []>} : vector<8x512xf32>, vector<512x2xf32>, vector<8x2xf32> -> vector<8x2xf32>
    %c0_3 = arith.constant 0 : index
    %c0_4 = arith.constant 0 : index
    %3 = vector.load %arg3[%c0_3, %c0_4] : memref<1x2xf32, #tpu.memory_space<vmem>>, vector<1x2xf32>
    %4 = vector.broadcast %3 : vector<1x2xf32> to vector<8x2xf32>
    %5 = arith.addf %2, %4 : vector<8x2xf32>
    %c0_5 = arith.constant 0 : index
    %c0_6 = arith.constant 0 : index
    %6 = vector.load %arg4[%c0_5, %c0_6] : memref<8x2xf32, #tpu.memory_space<vmem>>, vector<8x2xf32>
    tpu.vector_store %arg4[%c0_5, %c0_6], %5 {strides = array<i32>} : memref<8x2xf32, #tpu.memory_space<vmem>>, vector<8x2xf32>,
    return
  }
  func.func @transform_0(%arg0: i32) -> (i32, i32) {
    %c0_i32 = arith.constant 0 : i32
    %c0_i32_0 = arith.constant 0 : i32
    return %arg0, %c0_i32 : i32, i32
  }
  func.func @transform_1(%arg0: i32) -> (i32, i32) {
    %c0_i32 = arith.constant 0 : i32
    %c0_i32_0 = arith.constant 0 : i32
    %c0_i32_1 = arith.constant 0 : i32
    return %c0_i32, %c0_i32_0 : i32, i32
  }
  func.func @transform_2(%arg0: i32) -> (i32, i32) {
    %c0_i32 = arith.constant 0 : i32
    %c0_i32_0 = arith.constant 0 : i32
    %c0_i32_1 = arith.constant 0 : i32
    return %c0_i32, %c0_i32_0 : i32, i32
  }
  func.func @transform_3(%arg0: i32) -> (i32, i32) {
    %c0_i32 = arith.constant 0 : i32
    %c0_i32_0 = arith.constant 0 : i32
    return %arg0, %c0_i32 : i32, i32
  }
}

</mosaic_0001>

<llo_original>
// kernel: tpu_custom_call.1
$region0: #{tpu_custom_call.1}
  #allocation0 [shape = 'u32[]', space=smem, size = 0x4, offset = 0x4, fixed_abs, tag = 'smem constant byte address 0x4 - core index']
  #allocation1 [shape = 'u32[144,128]{1,0:T(1,128)}', space=vmem, size = 0x12000, scoped, tag = 'internal scratch']
  %s0 = inlined_call_operand.vmem [shape: f32[8,512], index: 0, kind: input, shape index: {}]
  %s1 = inlined_call_operand.vmem [shape: f32[512,2], index: 1, kind: input, shape index: {}]
  %s2 = inlined_call_operand.vmem [shape: f32[1,2], index: 2, kind: input, shape index: {}]
  %s3 = inlined_call_operand.vmem [shape: f32[8,2], index: 3, kind: output, shape index: {}]
  %s4 = sld [smem:[#allocation0]]
  $region22: #{tpu_custom_call.1} parent=0
    _
  %s6 = ssub.s32 1, %s4
  %s7 = scalar_select 0, %s6, %s4
  // Predicated region
  $region2: #{tpu_custom_call.1} parent=0 // pred_check
    _
  $region3: #{tpu_custom_call.1} parent=0 // pred_check_branch
    %9 = sbr.rel (0) target = $region5
  $region4: #{tpu_custom_call.1} parent=0 // pred_region
    _
  $region5: #{tpu_custom_call.1} parent=0 // pred_fallthru
    _
  // Predicated region
  $region6: #{tpu_custom_call.1} parent=0 // pred_check
    _
  $region7: #{tpu_custom_call.1} parent=0 // pred_check_branch
    %11 = sbr.rel (0) target = $region9
  $region8: #{tpu_custom_call.1} parent=0 // pred_region
    _
  $region9: #{tpu_custom_call.1} parent=0 // pred_fallthru
    _
  // Predicated region
  $region10: #{tpu_custom_call.1} parent=0 // pred_check
    _
  $region11: #{tpu_custom_call.1} parent=0 // pred_check_branch
    %13 = sbr.rel (0) target = $region13
  $region12: #{tpu_custom_call.1} parent=0 // pred_region
    _
  $region13: #{tpu_custom_call.1} parent=0 // pred_fallthru
    _
  %v14 = vld [vmem:[%s0] sm:$0xff]
  %v15 = vld [vmem:[%s0 + $0x8] sm:$0xff]
  %v16 = vld [vmem:[%s0 + $0x10] sm:$0xff]
  %v17 = vld [vmem:[%s0 + $0x18] sm:$0xff]
  %v18 = vld [vmem:[%s1] sm:$0xff]
  %v19 = vld [vmem:[%s1 + $0x8] sm:$0xff]
  %v20 = vld [vmem:[%s1 + $0x10] sm:$0xff]
  %v21 = vld [vmem:[%s1 + $0x18] sm:$0xff]
  %v22 = vld [vmem:[%s1 + $0x20] sm:$0xff]
  %v23 = vld [vmem:[%s1 + $0x28] sm:$0xff]
  %v24 = vld [vmem:[%s1 + $0x30] sm:$0xff]
  %v25 = vld [vmem:[%s1 + $0x38] sm:$0xff]
  %v26 = vld [vmem:[%s1 + $0x40] sm:$0xff]
  %v27 = vld [vmem:[%s1 + $0x48] sm:$0xff]
  %v28 = vld [vmem:[%s1 + $0x50] sm:$0xff]
  %v29 = vld [vmem:[%s1 + $0x58] sm:$0xff]
  %v30 = vld [vmem:[%s1 + $0x60] sm:$0xff]
  %v31 = vld [vmem:[%s1 + $0x68] sm:$0xff]
  %v32 = vld [vmem:[%s1 + $0x70] sm:$0xff]
  %v33 = vld [vmem:[%s1 + $0x78] sm:$0xff]
  %v34 = vld [vmem:[%s1 + $0x80] sm:$0xff]
  %v35 = vld [vmem:[%s1 + $0x88] sm:$0xff]
  %v36 = vld [vmem:[%s1 + $0x90] sm:$0xff]
  %v37 = vld [vmem:[%s1 + $0x98] sm:$0xff]
  %v38 = vld [vmem:[%s1 + $0xa0] sm:$0xff]
  %v39 = vld [vmem:[%s1 + $0xa8] sm:$0xff]
  %v40 = vld [vmem:[%s1 + $0xb0] sm:$0xff]
  %v41 = vld [vmem:[%s1 + $0xb8] sm:$0xff]
  %v42 = vld [vmem:[%s1 + $0xc0] sm:$0xff]
  %v43 = vld [vmem:[%s1 + $0xc8] sm:$0xff]
  %v44 = vld [vmem:[%s1 + $0xd0] sm:$0xff]
  %v45 = vld [vmem:[%s1 + $0xd8] sm:$0xff]
  %v46 = vld [vmem:[%s1 + $0xe0] sm:$0xff]
  %v47 = vld [vmem:[%s1 + $0xe8] sm:$0xff]
  %v48 = vld [vmem:[%s1 + $0xf0] sm:$0xff]
  %v49 = vld [vmem:[%s1 + $0xf8] sm:$0xff]
  %v50 = vld [vmem:[%s1 + $0x100] sm:$0xff]
  %v51 = vld [vmem:[%s1 + $0x108] sm:$0xff]
  %v52 = vld [vmem:[%s1 + $0x110] sm:$0xff]
  %v53 = vld [vmem:[%s1 + $0x118] sm:$0xff]
  %v54 = vld [vmem:[%s1 + $0x120] sm:$0xff]
  %v55 = vld [vmem:[%s1 + $0x128] sm:$0xff]
  %v56 = vld [vmem:[%s1 + $0x130] sm:$0xff]
  %v57 = vld [vmem:[%s1 + $0x138] sm:$0xff]
  %v58 = vld [vmem:[%s1 + $0x140] sm:$0xff]
  %v59 = vld [vmem:[%s1 + $0x148] sm:$0xff]
  %v60 = vld [vmem:[%s1 + $0x150] sm:$0xff]
  %v61 = vld [vmem:[%s1 + $0x158] sm:$0xff]
  %v62 = vld [vmem:[%s1 + $0x160] sm:$0xff]
  %v63 = vld [vmem:[%s1 + $0x168] sm:$0xff]
  %v64 = vld [vmem:[%s1 + $0x170] sm:$0xff]
  %v65 = vld [vmem:[%s1 + $0x178] sm:$0xff]
  %v66 = vld [vmem:[%s1 + $0x180] sm:$0xff]
  %v67 = vld [vmem:[%s1 + $0x188] sm:$0xff]
  %v68 = vld [vmem:[%s1 + $0x190] sm:$0xff]
  %v69 = vld [vmem:[%s1 + $0x198] sm:$0xff]
  %v70 = vld [vmem:[%s1 + $0x1a0] sm:$0xff]
  %v71 = vld [vmem:[%s1 + $0x1a8] sm:$0xff]
  %v72 = vld [vmem:[%s1 + $0x1b0] sm:$0xff]
  %v73 = vld [vmem:[%s1 + $0x1b8] sm:$0xff]
  %v74 = vld [vmem:[%s1 + $0x1c0] sm:$0xff]
  %v75 = vld [vmem:[%s1 + $0x1c8] sm:$0xff]
  %v76 = vld [vmem:[%s1 + $0x1d0] sm:$0xff]
  %v77 = vld [vmem:[%s1 + $0x1d8] sm:$0xff]
  %v78 = vld [vmem:[%s1 + $0x1e0] sm:$0xff]
  %v79 = vld [vmem:[%s1 + $0x1e8] sm:$0xff]
  %v80 = vld [vmem:[%s1 + $0x1f0] sm:$0xff]
  %v81 = vld [vmem:[%s1 + $0x1f8] sm:$0xff]
  %v82 = vld [vmem:[%s2] sm:$0x1]
  %v84 = vlaneseq
  %v85 = vshrl.u32 %v84, 7
  %v86 = vsub.s32 0, %v85
  %v87 = vrot.slane %v82, %v86
  %89 = vmatprep.subr.mxu0 0.0
  %90 = vmatpush1.msra.mxu0 %v18
  %91 = vmatprep.subr.mxu0 0.0
  %92 = vmatpush1.msra.mxu0 %v19
  %93 = vmatprep.subr.mxu0 0.0
  %94 = vmatpush1.msra.mxu0 %v20
  %95 = vmatprep.subr.mxu0 0.0
  %96 = vmatpush1.msra.mxu0 %v21
  %97 = vmatprep.subr.mxu0 0.0
  %98 = vmatpush1.msra.mxu0 %v22
  %99 = vmatprep.subr.mxu0 0.0
  %100 = vmatpush1.msra.mxu0 %v23
  %101 = vmatprep.subr.mxu0 0.0
  %102 = vmatpush1.msra.mxu0 %v24
  %103 = vmatprep.subr.mxu0 0.0
  %104 = vmatpush1.msra.mxu0 %v25
  %105 = vmatprep.subr.mxu0 0.0
  %106 = vmatpush1.msra.mxu0 %v26
  %107 = vmatprep.subr.mxu0 0.0
  %108 = vmatpush1.msra.mxu0 %v27
  %109 = vmatprep.subr.mxu0 0.0
  %110 = vmatpush1.msra.mxu0 %v28
  %111 = vmatprep.subr.mxu0 0.0
  %112 = vmatpush1.msra.mxu0 %v29
  %113 = vmatprep.subr.mxu0 0.0
  %114 = vmatpush1.msra.mxu0 %v30
  %115 = vmatprep.subr.mxu0 0.0
  %116 = vmatpush1.msra.mxu0 %v31
  %117 = vmatprep.subr.mxu0 0.0
  %118 = vmatpush1.msra.mxu0 %v32
  %119 = vmatprep.subr.mxu0 0.0
  %120 = vmatpush1.msra.mxu0 %v33
  %121 = vmatprep.subr.mxu0 0.0
  %122 = vmatpush1.msra.mxu0 %v34
  %123 = vmatprep.subr.mxu0 0.0
  %124 = vmatpush1.msra.mxu0 %v35
  %125 = vmatprep.subr.mxu0 0.0
  %126 = vmatpush1.msra.mxu0 %v36
  %127 = vmatprep.subr.mxu0 0.0
  %128 = vmatpush1.msra.mxu0 %v37
  %129 = vmatprep.subr.mxu0 0.0
  %130 = vmatpush1.msra.mxu0 %v38
  %131 = vmatprep.subr.mxu0 0.0
  %132 = vmatpush1.msra.mxu0 %v39
  %133 = vmatprep.subr.mxu0 0.0
  %134 = vmatpush1.msra.mxu0 %v40
  %135 = vmatprep.subr.mxu0 0.0
  %136 = vmatpush1.msra.mxu0 %v41
  %137 = vmatprep.subr.mxu0 0.0
  %138 = vmatpush1.msra.mxu0 %v42
  %139 = vmatprep.subr.mxu0 0.0
  %140 = vmatpush1.msra.mxu0 %v43
  %141 = vmatprep.subr.mxu0 0.0
  %142 = vmatpush1.msra.mxu0 %v44
  %143 = vmatprep.subr.mxu0 0.0
  %144 = vmatpush1.msra.mxu0 %v45
  %145 = vmatprep.subr.mxu0 0.0
  %146 = vmatpush1.msra.mxu0 %v46
  %147 = vmatprep.subr.mxu0 0.0
  %148 = vmatpush1.msra.mxu0 %v47
  %149 = vmatprep.subr.mxu0 0.0
  %150 = vmatpush1.msra.mxu0 %v48
  %151 = vmatprep.subr.mxu0 0.0
  %152 = vmatpush1.msra.mxu0 %v49
  %153 = vmatprep.mubr.f32.mxu0 %v15
  %154 = vmatmul.mubr.f32.gmra.mrb[0].mxu0 %v14
  %v155 = vpop.f32.mrb[0].mxu0
  %v156 = vadd.f32 %v87, %v155
  %v157 = vpop.f32.mrb[0].mxu0
  %158 = vdwg.mxu0
  %159 = vmatprep.subr.mxu0 0.0
  %160 = vmatpush1.msra.mxu0 %v50
  %161 = vmatprep.subr.mxu0 0.0
  %162 = vmatpush1.msra.mxu0 %v51
  %163 = vmatprep.subr.mxu0 0.0
  %164 = vmatpush1.msra.mxu0 %v52
  %165 = vmatprep.subr.mxu0 0.0
  %166 = vmatpush1.msra.mxu0 %v53
  %167 = vmatprep.subr.mxu0 0.0
  %168 = vmatpush1.msra.mxu0 %v54
  %169 = vmatprep.subr.mxu0 0.0
  %170 = vmatpush1.msra.mxu0 %v55
  %171 = vmatprep.subr.mxu0 0.0
  %172 = vmatpush1.msra.mxu0 %v56
  %173 = vmatprep.subr.mxu0 0.0
  %174 = vmatpush1.msra.mxu0 %v57
  %175 = vmatprep.subr.mxu0 0.0
  %176 = vmatpush1.msra.mxu0 %v58
  %177 = vmatprep.subr.mxu0 0.0
  %178 = vmatpush1.msra.mxu0 %v59
  %179 = vmatprep.subr.mxu0 0.0
  %180 = vmatpush1.msra.mxu0 %v60
  %181 = vmatprep.subr.mxu0 0.0
  %182 = vmatpush1.msra.mxu0 %v61
  %183 = vmatprep.subr.mxu0 0.0
  %184 = vmatpush1.msra.mxu0 %v62
  %185 = vmatprep.subr.mxu0 0.0
  %186 = vmatpush1.msra.mxu0 %v63
  %187 = vmatprep.subr.mxu0 0.0
  %188 = vmatpush1.msra.mxu0 %v64
  %189 = vmatprep.subr.mxu0 0.0
  %190 = vmatpush1.msra.mxu0 %v65
  %191 = vmatprep.subr.mxu0 0.0
  %192 = vmatpush1.msra.mxu0 %v66
  %193 = vmatprep.subr.mxu0 0.0
  %194 = vmatpush1.msra.mxu0 %v67
  %195 = vmatprep.subr.mxu0 0.0
  %196 = vmatpush1.msra.mxu0 %v68
  %197 = vmatprep.subr.mxu0 0.0
  %198 = vmatpush1.msra.mxu0 %v69
  %199 = vmatprep.subr.mxu0 0.0
  %200 = vmatpush1.msra.mxu0 %v70
  %201 = vmatprep.subr.mxu0 0.0
  %202 = vmatpush1.msra.mxu0 %v71
  %203 = vmatprep.subr.mxu0 0.0
  %204 = vmatpush1.msra.mxu0 %v72
  %205 = vmatprep.subr.mxu0 0.0
  %206 = vmatpush1.msra.mxu0 %v73
  %207 = vmatprep.subr.mxu0 0.0
  %208 = vmatpush1.msra.mxu0 %v74
  %209 = vmatprep.subr.mxu0 0.0
  %210 = vmatpush1.msra.mxu0 %v75
  %211 = vmatprep.subr.mxu0 0.0
  %212 = vmatpush1.msra.mxu0 %v76
  %213 = vmatprep.subr.mxu0 0.0
  %214 = vmatpush1.msra.mxu0 %v77
  %215 = vmatprep.subr.mxu0 0.0
  %216 = vmatpush1.msra.mxu0 %v78
  %217 = vmatprep.subr.mxu0 0.0
  %218 = vmatpush1.msra.mxu0 %v79
  %219 = vmatprep.subr.mxu0 0.0
  %220 = vmatpush1.msra.mxu0 %v80
  %221 = vmatprep.subr.mxu0 0.0
  %222 = vmatpush1.msra.mxu0 %v81
  %223 = vmatprep.mubr.f32.mxu0 %v17
  %224 = vmatmul.mubr.f32.gmra.mrb[0].mxu0 %v16
  %v225 = vpop.f32.mrb[0].mxu0
  %v226 = vadd.f32 %v156, %v225
  %v227 = vpop.f32.mrb[0].mxu0
  %228 = vdwg.mxu0
  %vm229 = vcmask 15360
  %230 = vst.msk [vmem:[%s3] sm:$0xff] %vm229, %v226
  // Predicated region
  $region14: #{tpu_custom_call.1} parent=0 // pred_check
    _
  $region15: #{tpu_custom_call.1} parent=0 // pred_check_branch
    %232 = sbr.rel (0) target = $region17
  $region16: #{tpu_custom_call.1} parent=0 // pred_region
    _
  $region17: #{tpu_custom_call.1} parent=0 // pred_fallthru
    _
  // Predicated region
  $region18: #{tpu_custom_call.1} parent=0 // pred_check
    _
  $region19: #{tpu_custom_call.1} parent=0 // pred_check_branch
    %234 = sbr.rel (0) target = $region21
  $region20: #{tpu_custom_call.1} parent=0 // pred_region
    _
  $region21: #{tpu_custom_call.1} parent=0 // pred_fallthru
    _

</llo_original>
